<compile_context>
chip_gen: v7x
topology: tpu7x:2x2x1
jax: 0.10.0
libtpu: 0.0.40
codegen_flags: <defaults>
</compile_context>

<pallas_src>
import functools

import jax
import jax.numpy as jnp
from jax import lax
from jax.experimental import pallas as pl
from jax.experimental.pallas import tpu as pltpu

LANES = 128
SUBLANES = 8
CHUNK_ROWS = 512        # rows per in-kernel sub-chunk (512x128 f32 = 64 vregs)
MAX_BLOCK_ROWS = 4096   # 4096x128 f32 = 2 MiB; 2 inputs x 2 bufs = 8 MiB VMEM


def _round_up(x, m):
    return ((x + m - 1) // m) * m


def _num_tensorcores():
    """Best-effort TensorCore count (2 on v7x, 1 on v5e/v6e); defaults to 1."""
    try:
        info = pltpu.get_tpu_info()
    except Exception:
        return 1
    for name in ("num_cores", "core_count", "num_tensorcores",
                 "tensorcores_per_chip", "cores_per_chip"):
        val = getattr(info, name, None)
        if isinstance(val, int) and val > 0:
            return val
    return 1


def _mape_kernel(yhat_ref, y_ref, out_ref, *,
                 eps, rows, block_rows, chunk_rows, inner_blocks,
                 needs_mask, approx_recip):
    """Accumulate sum(|yhat - y| / (y + eps)) for this shard into out_ref."""
    s = pl.program_id(0)   # shard (one per TensorCore when num_shards == 2)
    i = pl.program_id(1)   # row-block within the shard (sequential reduction)

    # The (1, 8, 128) output block is this shard's resident accumulator.
    @pl.when(i == 0)
    def _():
        out_ref[...] = jnp.zeros_like(out_ref)

    blk = s * inner_blocks + i            # logical row-block index
    n_chunks = block_rows // chunk_rows

    def chunk_sum(c, masked):
        if isinstance(c, int):
            r0 = c * chunk_rows
        else:
            r0 = pl.multiple_of(c * chunk_rows, chunk_rows)
        yhat = yhat_ref[pl.ds(r0, chunk_rows), :].astype(jnp.float32)
        y = y_ref[pl.ds(r0, chunk_rows), :].astype(jnp.float32)
        # |a/d - b/d| == |a - b| / d  -> one divide per element.
        num = jnp.abs(yhat - y)
        denom = y + eps
        if approx_recip:
            diff = num * pl.reciprocal(denom, approx=True)   # EUP slot
        else:
            diff = num / denom
        if masked:
            row_ids = (blk * block_rows + r0
                       + lax.broadcasted_iota(jnp.int32, (chunk_rows, 1), 0))
            diff = jnp.where(row_ids < rows, diff, 0.0)
        # Elementwise (VPU) fold into an (8, 128) vreg-shaped partial.
        return diff.reshape(-1, SUBLANES, LANES).sum(axis=0)

    def accumulate(masked):
        if n_chunks == 1:
            acc = chunk_sum(0, masked)
        else:
            acc = lax.fori_loop(
                0, n_chunks,
                lambda c, a: a + chunk_sum(c, masked),
                jnp.zeros((SUBLANES, LANES), jnp.float32),
                unroll=True)
        out_ref[0] += acc

    if not needs_mask:
        # Statically known: every block is fully inside the valid row range.
        accumulate(masked=False)
    else:
        # Mask only blocks that overhang the valid rows (ragged tail block or
        # a clamped, overhanging shard step); interior blocks stay mask-free.
        is_full = (blk + 1) * block_rows <= rows

        @pl.when(is_full)
        def _():
            accumulate(masked=False)

        @pl.when(jnp.logical_not(is_full))
        def _():
            accumulate(masked=True)


def mape(yhat, y, eps=1e-6, approx_recip=False):
    """Pallas MAPE. Returns a 0-d f32 device scalar (use float(...) for .item())."""
    assert yhat.shape == y.shape
    n_elems = yhat.size

    flat_yhat = yhat.reshape(-1)
    flat_y = y.reshape(-1)

    # Lane tail (rare, <128 elements of pad): pad both inputs with identical
    # values so padded entries contribute exactly zero.  The 128-divisible
    # common case below is a copy-free reshape.
    # TODO(synk): a fully copy-free ragged-lane path needs 1-D blocks or a
    # manual-DMA tail gather; not worth the complexity for <128 elements.
    lane_pad = (-n_elems) % LANES
    if lane_pad:
        pad = jnp.ones((lane_pad,), flat_y.dtype)
        flat_yhat = jnp.concatenate([flat_yhat, pad.astype(flat_yhat.dtype)])
        flat_y = jnp.concatenate([flat_y, pad])

    rows = flat_yhat.size // LANES
    yhat2d = flat_yhat.reshape(rows, LANES)
    y2d = flat_y.reshape(rows, LANES)

    # Block sizing: large row blocks (multiple of CHUNK_ROWS) for big inputs,
    # a single rounded-to-8 block for small ones.
    if rows >= CHUNK_ROWS:
        block_rows = min(MAX_BLOCK_ROWS, _round_up(rows, CHUNK_ROWS))
    else:
        block_rows = _round_up(rows, SUBLANES)
    chunk_rows = min(CHUNK_ROWS, block_rows)
    assert block_rows % chunk_rows == 0

    nb = pl.cdiv(rows, block_rows)

    # 2-way shard only when the chip actually has 2 TensorCores (v7x); on
    # v5e/v6e this stays 1, so no clamped duplicate block is ever DMA'd.
    # TODO(synk): on v7x, verify with a profile that the "parallel" shard axis
    # lands on both TensorCores; otherwise switch to CORE_PARALLEL / core_map.
    num_shards = 2 if (_num_tensorcores() >= 2 and nb >= 2) else 1
    inner = pl.cdiv(nb, num_shards)

    # Masking needed only if some block can overhang the valid row range.
    needs_mask = (rows % block_rows != 0) or (num_shards * inner != nb)

    def in_map(s, i):
        # Clamp so overhanging shard steps re-read a valid block (it is fully
        # masked out inside the kernel).
        return (jnp.minimum(s * inner + i, nb - 1), 0)

    kernel = functools.partial(
        _mape_kernel,
        eps=eps,
        rows=rows,
        block_rows=block_rows,
        chunk_rows=chunk_rows,
        inner_blocks=inner,
        needs_mask=needs_mask,
        approx_recip=approx_recip,
    )

    partials = pl.pallas_call(
        kernel,
        out_shape=jax.ShapeDtypeStruct((num_shards, SUBLANES, LANES),
                                       jnp.float32),
        grid_spec=pltpu.PrefetchScalarGridSpec(
            num_scalar_prefetch=0,
            grid=(num_shards, inner),
            in_specs=[
                pl.BlockSpec((block_rows, LANES), in_map),
                pl.BlockSpec((block_rows, LANES), in_map),
            ],
            out_specs=pl.BlockSpec((1, SUBLANES, LANES),
                                   lambda s, i: (s, 0, 0)),
        ),
        compiler_params=pltpu.CompilerParams(
            dimension_semantics=("parallel", "arbitrary")),
    )(yhat2d, y2d)

    # Cross-lane reduce + 100/N scaling on device in the wrapper (lane-dense
    # kernel output is robust on v5e/v6e/v7x and costs ~4 KiB/shard of HBM).
    return jnp.sum(partials) * jnp.float32(100.0 / n_elems)


if __name__ == "__main__":
    eps = 1e-6

    def ref_mape(yhat, y):
        return 100.0 * jnp.mean(jnp.abs(yhat / (y + eps) - y / (y + eps)))

    key = jax.random.PRNGKey(0)
    # Cases: single small block; ragged (masked) tail block; non-128-divisible
    # element count (lane pad); multi-block grid reduction with masked tail.
    shapes = [(2, 4, 16, 16), (4, 8, 64, 100), (3, 5, 7, 11), (2, 4, 512, 260)]
    for idx, shp in enumerate(shapes):
        k1, k2 = jax.random.split(jax.random.fold_in(key, idx))
        yhat = jax.random.normal(k1, shp, dtype=jnp.float32)
        # Keep y away from zero so the metric is well conditioned.
        y = jax.random.uniform(k2, shp, dtype=jnp.float32, minval=0.5, maxval=2.0)

        out = mape(yhat, y, eps=eps)
        jax.block_until_ready(out)

        ref = float(ref_mape(yhat, y))
        got = float(out)
        assert abs(got - ref) < 1e-3 * max(1.0, abs(ref)), (shp, got, ref)

    print("KERNEL_OK")
</pallas_src>

<mosaic_0001>
module attributes {stable_mosaic.version = 11 : i64} {
  func.func @_mape_kernel(%arg0: i32, %arg1: i32, %arg2: memref<16x128xf32, #tpu.memory_space<vmem>>, %arg3: memref<16x128xf32, #tpu.memory_space<vmem>>, %arg4: memref<1x8x128xf32, #tpu.memory_space<vmem>>) attributes {dimension_semantics = [#tpu.dimension_semantics<parallel>, #tpu.dimension_semantics<arbitrary>], iteration_bounds = array<i64: 1, 1>, scalar_prefetch = 0 : i64, scratch_operands = 0 : i64, tpu.core_type = #tpu.core_type<tc>, window_params = [{transform_indices = @transform_0, window_bounds = array<i64: 16, 128>}, {transform_indices = @transform_1, window_bounds = array<i64: 16, 128>}, {transform_indices = @transform_2, window_bounds = array<i64: 1, 8, 128>}]} {
    %c0_i32 = arith.constant 0 : i32
    %0 = arith.cmpi eq, %arg1, %c0_i32 : i32
    %1 = arith.extui %0 : i1 to i32
    %c0_i32_0 = arith.constant 0 : i32
    %2 = arith.cmpi ne, %1, %c0_i32_0 : i32
    scf.if %2 {
      %cst_11 = arith.constant 0.000000e+00 : f32
      %18 = vector.broadcast %cst_11 : f32 to vector<1x8x128xf32>
      %c0_12 = arith.constant 0 : index
      %c0_13 = arith.constant 0 : index
      %c0_14 = arith.constant 0 : index
      %19 = vector.load %arg4[%c0_12, %c0_13, %c0_14] : memref<1x8x128xf32, #tpu.memory_space<vmem>>, vector<1x8x128xf32>
      tpu.vector_store %arg4[%c0_12, %c0_13, %c0_14], %18 {strides = array<i32>} : memref<1x8x128xf32, #tpu.memory_space<vmem>>, vector<1x8x128xf32>,
    } else {
    }
    %c0 = arith.constant 0 : index
    %c0_1 = arith.constant 0 : index
    %3 = vector.load %arg2[%c0, %c0_1] : memref<16x128xf32, #tpu.memory_space<vmem>>, vector<16x128xf32>
    %c0_2 = arith.constant 0 : index
    %c0_3 = arith.constant 0 : index
    %4 = vector.load %arg3[%c0_2, %c0_3] : memref<16x128xf32, #tpu.memory_space<vmem>>, vector<16x128xf32>
    %5 = arith.subf %3, %4 : vector<16x128xf32>
    %6 = math.absf %5 : vector<16x128xf32>
    %cst = arith.constant 9.99999997E-7 : f32
    %7 = vector.broadcast %cst : f32 to vector<16x128xf32>
    %8 = arith.addf %4, %7 : vector<16x128xf32>
    %9 = arith.divf %6, %8 : vector<16x128xf32>
    %10 = vector.shape_cast %9 : vector<16x128xf32> to vector<2x8x128xf32>
    %cst_4 = arith.constant dense<0.000000e+00> : vector<8x128xf32>
    %11 = vector.multi_reduction <add>, %10, %cst_4 [0] : vector<2x8x128xf32> to vector<8x128xf32>
    %c0_5 = arith.constant 0 : index
    %c0_6 = arith.constant 0 : index
    %c0_7 = arith.constant 0 : index
    %12 = vector.load %arg4[%c0_5, %c0_6, %c0_7] : memref<1x8x128xf32, #tpu.memory_space<vmem>>, vector<1x8x128xf32>
    %13 = vector.shape_cast %12 : vector<1x8x128xf32> to vector<8x128xf32>
    %14 = arith.addf %13, %11 : vector<8x128xf32>
    %c0_8 = arith.constant 0 : index
    %c0_9 = arith.constant 0 : index
    %c0_10 = arith.constant 0 : index
    %15 = vector.load %arg4[%c0_8, %c0_9, %c0_10] : memref<1x8x128xf32, #tpu.memory_space<vmem>>, vector<1x8x128xf32>
    %16 = vector.shape_cast %15 : vector<1x8x128xf32> to vector<8x128xf32>
    %17 = vector.shape_cast %14 : vector<8x128xf32> to vector<1x8x128xf32>
    tpu.vector_store %arg4[%c0_8, %c0_9, %c0_10], %17 {strides = array<i32>} : memref<1x8x128xf32, #tpu.memory_space<vmem>>, vector<1x8x128xf32>,
    return
  }
  func.func @transform_0(%arg0: i32, %arg1: i32) -> (i32, i32) {
    %c1_i32 = arith.constant 1 : i32
    %0 = arith.muli %arg0, %c1_i32 : i32
    %1 = arith.addi %0, %arg1 : i32
    %c0_i32 = arith.constant 0 : i32
    %2 = arith.minsi %1, %c0_i32 : i32
    %c0_i32_0 = arith.constant 0 : i32
    %c0_i32_1 = arith.constant 0 : i32
    return %2, %c0_i32_0 : i32, i32
  }
  func.func @transform_1(%arg0: i32, %arg1: i32) -> (i32, i32) {
    %c1_i32 = arith.constant 1 : i32
    %0 = arith.muli %arg0, %c1_i32 : i32
    %1 = arith.addi %0, %arg1 : i32
    %c0_i32 = arith.constant 0 : i32
    %2 = arith.minsi %1, %c0_i32 : i32
    %c0_i32_0 = arith.constant 0 : i32
    %c0_i32_1 = arith.constant 0 : i32
    return %2, %c0_i32_0 : i32, i32
  }
  func.func @transform_2(%arg0: i32, %arg1: i32) -> (i32, i32, i32) {
    %c0_i32 = arith.constant 0 : i32
    %c0_i32_0 = arith.constant 0 : i32
    %c0_i32_1 = arith.constant 0 : i32
    return %arg0, %c0_i32, %c0_i32_0 : i32, i32, i32
  }
}

</mosaic_0001>

<llo_original>
// kernel: tpu_custom_call.1
$region0: #{tpu_custom_call.1}
  #allocation0 [shape = 'u32[]', space=smem, size = 0x4, offset = 0x4, fixed_abs, tag = 'smem constant byte address 0x4 - core index']
  #allocation1 [shape = 'u32[144,128]{1,0:T(1,128)}', space=vmem, size = 0x12000, scoped, tag = 'internal scratch']
  %s0 = inlined_call_operand.hbm [shape: f32[16,128], index: 0, kind: input, shape index: {}]
  %s1 = inlined_call_operand.hbm [shape: f32[16,128], index: 1, kind: input, shape index: {}]
  %s2 = inlined_call_operand.hbm [shape: f32[1,8,128], index: 2, kind: output, shape index: {}]
  %s3 = sld [smem:[#allocation0]]
  $region30: #{tpu_custom_call.1} parent=0
    _
  %s5 = ssub.s32 1, %s3
  %s6 = scalar_select 0, %s5, %s3
  $region1: #{tpu_custom_call.1} parent=0
    #allocation2 [shape = 'u8[8192]{0}', space=vmem, size = 0x2000, scoped, tag = 'input window, operand 0, single buffered']
    #allocation3 [shape = 's32[1]{0}', space=sflag, size = 0x4, scoped, tag = 'scoped memory for tpu_custom_call.1']
    #allocation4 [shape = 's32[1]{0}', space=sflag, size = 0x4, scoped, tag = 'scoped memory for tpu_custom_call.1']
    #allocation5 [shape = 'u8[8192]{0}', space=vmem, size = 0x2000, scoped, tag = 'input window, operand 1, single buffered']
    #allocation6 [shape = 's32[1]{0}', space=sflag, size = 0x4, scoped, tag = 'scoped memory for tpu_custom_call.1']
    #allocation7 [shape = 'u8[4096]{0}', space=vmem, size = 0x1000, scoped, tag = 'output window, operand 0, single buffered']
    %7 = vsyncpa [#allocation3], 0
    %8 = vsyncpa [#allocation6], 0
    %9 = vsyncpa [#allocation4], 0
    // Predicated region
    $region2: #{tpu_custom_call.1} parent=1 // pred_check
      _
    $region3: #{tpu_custom_call.1} parent=1 // pred_check_branch
      %11 = sbr.rel (0) target = $region5
    $region4: #{tpu_custom_call.1} parent=1 // pred_region
      %s12 = sadd.s32 0, 0
      %p13 = scmp.lt.s32.totalorder %s12, 0
      %s14 = scalar_select %p13, %s12, 0
      %s15 = smul.u32 2, %s14
      %s17 = ssub.s32 256, 256
      %18 = vsyncadd [#allocation3], %s17
      %s19 = smul.addr %s15, 128
      %s20 = scalar_lea.hbm %s0, %s19
      %s21 = sshll.u32 [#allocation2], 4
      %s22 = int_to_ptr.vmem [resolvable:$true] %s21
      %27 = dma.hbm_to_vmem [thread:$0]  %s20, 256, %s22, [#allocation3], 128, 128, 8
    $region5: #{tpu_custom_call.1} parent=1 // pred_fallthru
      _
    // Predicated region
    $region6: #{tpu_custom_call.1} parent=1 // pred_check
      _
    $region7: #{tpu_custom_call.1} parent=1 // pred_check_branch
      %29 = sbr.rel (0) target = $region9
    $region8: #{tpu_custom_call.1} parent=1 // pred_region
      %s30 = sadd.s32 0, 0
      %p31 = scmp.lt.s32.totalorder %s30, 0
      %s32 = scalar_select %p31, %s30, 0
      %s33 = smul.u32 2, %s32
      %s35 = ssub.s32 256, 256
      %36 = vsyncadd [#allocation6], %s35
      %s37 = smul.addr %s33, 128
      %s38 = scalar_lea.hbm %s1, %s37
      %s39 = sshll.u32 [#allocation5], 4
      %s40 = int_to_ptr.vmem [resolvable:$true] %s39
      %45 = dma.hbm_to_vmem [thread:$0]  %s38, 256, %s40, [#allocation6], 128, 128, 8
    $region9: #{tpu_custom_call.1} parent=1 // pred_fallthru
      _
    // Predicated region
    $region10: #{tpu_custom_call.1} parent=1 // pred_check
      _
    $region11: #{tpu_custom_call.1} parent=1 // pred_check_branch
      %47 = sbr.rel (0) target = $region13
    $region12: #{tpu_custom_call.1} parent=1 // pred_region
      %48 = dma.done [#allocation3], 256
    $region13: #{tpu_custom_call.1} parent=1 // pred_fallthru
      _
    // Predicated region
    $region14: #{tpu_custom_call.1} parent=1 // pred_check
      _
    $region15: #{tpu_custom_call.1} parent=1 // pred_check_branch
      %50 = sbr.rel (0) target = $region17
    $region16: #{tpu_custom_call.1} parent=1 // pred_region
      %51 = dma.done [#allocation6], 256
    $region17: #{tpu_custom_call.1} parent=1 // pred_fallthru
      _
    %s52 = sadd.s32 0, 0
    %p53 = scmp.lt.s32.totalorder %s52, 0
    %s54 = scalar_select %p53, %s52, 0
    %s55 = smul.u32 2, %s54
    %s56 = sadd.s32 0, 0
    %p57 = scmp.lt.s32.totalorder %s56, 0
    %s58 = scalar_select %p57, %s56, 0
    %s59 = smul.u32 2, %s58
    %p60 = scmp.eq.s32.totalorder 0, 0
    // Predicated region
    $region18: #{tpu_custom_call.1} parent=1 // pred_check
      %p61 = pneg %p60
    $region19: #{tpu_custom_call.1} parent=1 // pred_check_branch
      %63 = sbr.rel (%p61) target = $region21
    $region20: #{tpu_custom_call.1} parent=1 // pred_region
      %64 = vst [vmem:[#allocation7] sm:$0xff] 0.0
    $region21: #{tpu_custom_call.1} parent=1 // pred_fallthru
      _
    %v65 = vld [vmem:[#allocation2] sm:$0xff]
    %v66 = vld [vmem:[#allocation2 + $0x8] sm:$0xff]
    %v67 = vld [vmem:[#allocation5] sm:$0xff]
    %v68 = vld [vmem:[#allocation5 + $0x8] sm:$0xff]
    %v69 = vsub.f32 %v65, %v67
    %v70 = vsub.f32 %v66, %v68
    %v71 = vand.u32 2147483647, %v69
    %v72 = vand.u32 2147483647, %v70
    %v73 = vadd.f32 %v67, 1e-06
    %v74 = vadd.f32 %v68, 1e-06
    %v75 = vrcp.pop %v73
    %v76 = vmul.f32 %v71, %v75
    %v77 = vrcp.pop %v74
    %v78 = vmul.f32 %v72, %v77
    %v79 = vadd.f32 %v76, %v78
    %v80 = vld [vmem:[#allocation7] sm:$0xff]
    %v81 = vadd.f32 %v80, %v79
    %82 = vst [vmem:[#allocation7] sm:$0xff] %v81
    // Predicated region
    $region22: #{tpu_custom_call.1} parent=1 // pred_check
      _
    $region23: #{tpu_custom_call.1} parent=1 // pred_check_branch
      %84 = sbr.rel (0) target = $region25
    $region24: #{tpu_custom_call.1} parent=1 // pred_region
      %s86 = ssub.s32 128, 128
      %87 = vsyncadd [#allocation4], %s86
      %s89 = sshll.u32 [#allocation7], 4
      %s90 = int_to_ptr.vmem [resolvable:$true] %s89
      %92 = dma.vmem_to_hbm [thread:$0]  %s90, 128, %s2, [#allocation4]
    $region25: #{tpu_custom_call.1} parent=1 // pred_fallthru
      _
    // Predicated region
    $region26: #{tpu_custom_call.1} parent=1 // pred_check
      _
    $region27: #{tpu_custom_call.1} parent=1 // pred_check_branch
      %94 = sbr.rel (0) target = $region29
    $region28: #{tpu_custom_call.1} parent=1 // pred_region
      %95 = dma.done [#allocation4], 128
    $region29: #{tpu_custom_call.1} parent=1 // pred_fallthru
      _
    %96 = vsyncpa [#allocation3], 1
    %97 = vsyncpa [#allocation6], 1
    %98 = vsyncpa [#allocation4], 1

</llo_original>
